<compile_context>
chip_gen: v5e
topology: v5e:2x2
jax: 0.10.0
libtpu: 0.0.40
codegen_flags: <defaults>
</compile_context>

<pallas_src>
import functools

import jax
import jax.numpy as jnp
from jax.experimental import pallas as pl
from jax.experimental.pallas import tpu as pltpu

ALPHA = 0.95
_NEG_BIG = -1e30          # finite "-inf": masked lanes never produce inf-inf=nan
_MAX_TILE_COLS = 8192     # stream the class axis in blocks beyond this width


def _soft_ce_kernel(x_ref, t_ref, out_ref,
                    m_t, s_t, a_t, m_x, s_x,
                    *, n_rows, n_cols, tile_rows, tile_cols, mask_cols):
    i = pl.program_id(0)          # row-block index ("parallel")
    k = pl.program_id(1)          # class-block index ("arbitrary", innermost)
    nk = pl.num_programs(1)

    @pl.when(k == 0)
    def _init():
        m_t[...] = jnp.full(m_t.shape, _NEG_BIG, jnp.float32)
        m_x[...] = jnp.full(m_x.shape, _NEG_BIG, jnp.float32)
        s_t[...] = jnp.zeros(s_t.shape, jnp.float32)
        s_x[...] = jnp.zeros(s_x.shape, jnp.float32)
        a_t[...] = jnp.zeros(a_t.shape, jnp.float32)

    x = x_ref[...].astype(jnp.float32)      # (TN, TC) prediction logits
    t = t_ref[...].astype(jnp.float32)      # (TN, TC) soft-label logits

    if mask_cols:
        # Ragged last C block: neutralize garbage columns before any reduce.
        col_ids = k * tile_cols + jax.lax.broadcasted_iota(
            jnp.int32, (tile_rows, tile_cols), 1)
        col_ok = col_ids < n_cols
        x = jnp.where(col_ok, x, _NEG_BIG)
        t = jnp.where(col_ok, t, _NEG_BIG)

    # --- online softmax stats for the soft targets + KL numerator ----------
    m_t_new = jnp.maximum(m_t[...], jnp.max(t, axis=1, keepdims=True))
    scale_t = jnp.exp(m_t[...] - m_t_new)
    e_t = jnp.exp(t - m_t_new)
    s_t[...] = s_t[...] * scale_t + jnp.sum(e_t, axis=1, keepdims=True)
    # Reduce sum_c exp_t * (t - x) now; the per-row (lse_x - lse_t) is added
    # after the reduce -> no (TN, TC) broadcast temporary.
    a_t[...] = a_t[...] * scale_t + jnp.sum(e_t * (t - x), axis=1, keepdims=True)
    m_t[...] = m_t_new

    # --- online logsumexp for the prediction logits -------------------------
    m_x_new = jnp.maximum(m_x[...], jnp.max(x, axis=1, keepdims=True))
    s_x[...] = s_x[...] * jnp.exp(m_x[...] - m_x_new) + jnp.sum(
        jnp.exp(x - m_x_new), axis=1, keepdims=True)
    m_x[...] = m_x_new

    @pl.when(k == nk - 1)
    def _finalize():
        lse_x = m_x[...] + jnp.log(s_x[...])
        lse_t = m_t[...] + jnp.log(s_t[...])
        row_kl = a_t[...] / s_t[...] + (lse_x - lse_t)      # (TN, 1), exact divide
        # Ragged last row tile: padded rows contribute exactly 0 (select, so
        # NaN/Inf garbage cannot leak).
        row_ids = i * tile_rows + jax.lax.broadcasted_iota(
            jnp.int32, (tile_rows, 1), 0)
        row_kl = jnp.where(row_ids < n_rows, row_kl, 0.0)
        # One scalar per row tile, written as a lane-dense block (unmasked vst).
        out_ref[...] = jnp.full(out_ref.shape, jnp.sum(row_kl), jnp.float32)


def _pick_tile_cols(c, tile_cols):
    if tile_cols is None:
        tc = c if c <= _MAX_TILE_COLS else _MAX_TILE_COLS
    else:
        tc = int(min(tile_cols, c))
    if tc != c:
        assert tc % 128 == 0, "tile_cols must equal C or be a multiple of 128"
    mask_cols = (c % tc) != 0
    return tc, mask_cols


def _pick_tile_rows(n, tile_cols, in_itemsize):
    """Rows per tile, sized against a generation-aware VMEM working-set budget."""
    try:
        vmem_cap = pltpu.get_tpu_info().vmem_capacity_bytes
    except Exception:  # conservative fallback if the query is unavailable
        vmem_cap = 128 * 1024 * 1024
    # Smaller budget on 64-MiB-VMEM parts (v7x) than on 128-MiB parts
    # (v5e/v6e): >=512-row tiles already sit near the HBM roofline, so
    # shrinking the tile costs nothing but avoids spills.
    budget = (10 if vmem_cap <= 64 * 1024 * 1024 else 20) * 1024 * 1024
    # Count BOTH 2 inputs x 2 pipeline buffers at the input dtype AND ~4
    # tile-sized f32 compute intermediates (exp / diff / masks).
    per_row = 2 * 2 * tile_cols * in_itemsize + 4 * tile_cols * 4
    row_mult = 16 if in_itemsize < 4 else 8   # bf16 sublane packing
    tn = budget // max(per_row, 1)
    tn = int(max(row_mult, min(1024, (tn // row_mult) * row_mult)))
    # Cap so a modest batch still yields >= 2 row blocks: the "parallel" row
    # axis shards across v7x's two TensorCores (and enables pipelining on
    # single-TC v5e/v6e). Tiny N naturally collapses to a single block.
    half = -(-n // 2)
    half_up = -(-half // row_mult) * row_mult
    tn = min(tn, max(row_mult, half_up))
    n_pad = -(-n // row_mult) * row_mult
    return min(tn, max(row_mult, n_pad))


def soft_cross_entropy(inputs, target, true_labels=None, *, alpha=ALPHA,
                       tile_rows=None, tile_cols=None):
    """alpha * KLDivLoss(size_average=False)(log_softmax(inputs), softmax(target)).

    `true_labels` is accepted but unused: the "(1 - alpha) * cross_entropy"
    term in the original PyTorch forward is a dead statement (stray '+').
    """
    del true_labels
    n, c = inputs.shape
    assert target.shape == (n, c)
    itemsize = max(jnp.dtype(inputs.dtype).itemsize,
                   jnp.dtype(target.dtype).itemsize)

    tc, mask_cols = _pick_tile_cols(c, tile_cols)
    tn = tile_rows if tile_rows is not None else _pick_tile_rows(n, tc, itemsize)
    assert tn % 8 == 0, "tile_rows must be a multiple of 8"

    num_rb = pl.cdiv(n, tn)
    num_cb = pl.cdiv(c, tc)

    kernel = functools.partial(
        _soft_ce_kernel, n_rows=n, n_cols=c, tile_rows=tn, tile_cols=tc,
        mask_cols=mask_cols)

    cost = pl.CostEstimate(
        flops=8 * n * c,
        transcendentals=2 * n * c,
        bytes_accessed=2 * n * c * itemsize + num_rb * 128 * 4)

    partials = pl.pallas_call(
        kernel,
        out_shape=jax.ShapeDtypeStruct((num_rb, 1, 128), jnp.float32),
        grid_spec=pltpu.PrefetchScalarGridSpec(
            num_scalar_prefetch=0,
            grid=(num_rb, num_cb),
            in_specs=[
                pl.BlockSpec((tn, tc), lambda i, k: (i, k)),
                pl.BlockSpec((tn, tc), lambda i, k: (i, k)),
            ],
            out_specs=pl.BlockSpec((1, 1, 128), lambda i, k: (i, 0, 0)),
            scratch_shapes=[pltpu.VMEM((tn, 1), jnp.float32)
                            for _ in range(5)],
        ),
        compiler_params=pltpu.CompilerParams(
            dimension_semantics=("parallel", "arbitrary"),
            vmem_limit_bytes=32 * 1024 * 1024,
        ),
        cost_estimate=cost,
    )(inputs, target)

    # Tiny final reduction (num_row_blocks elements) + alpha scale in wrapper.
    return alpha * jnp.sum(partials[:, 0, 0])


def _reference(inputs, target, alpha=ALPHA):
    x = inputs.astype(jnp.float32)
    t = target.astype(jnp.float32)
    log_p_x = jax.nn.log_softmax(x, axis=1)
    p_t = jax.nn.softmax(t, axis=1)
    log_p_t = jax.nn.log_softmax(t, axis=1)
    return alpha * jnp.sum(p_t * (log_p_t - log_p_x))


if __name__ == "__main__":
    key = jax.random.PRNGKey(0)
    ks = jax.random.split(key, 8)

    # 1) Small single-tile case: batch of 8 predictions over 32 classes.
    N, C = 8, 32
    inputs = jax.random.normal(ks[0], (N, C), dtype=jnp.float32)
    target = jax.random.normal(ks[1], (N, C), dtype=jnp.float32)
    true_labels = jax.random.randint(ks[2], (N,), 0, C, dtype=jnp.int32)
    loss = soft_cross_entropy(inputs, target, true_labels)
    jax.block_until_ready(loss)
    ref = _reference(inputs, target)
    assert jnp.allclose(loss, ref, rtol=1e-5, atol=1e-5), (loss, ref)

    # 2) Multi-row-block + ragged last row tile: N=20 with 8-row tiles.
    N2, C2 = 20, 256
    inputs2 = jax.random.normal(ks[3], (N2, C2), dtype=jnp.float32)
    target2 = jax.random.normal(ks[4], (N2, C2), dtype=jnp.float32)
    loss2 = soft_cross_entropy(inputs2, target2, None, tile_rows=8)
    jax.block_until_ready(loss2)
    ref2 = _reference(inputs2, target2)
    assert jnp.allclose(loss2, ref2, rtol=1e-5, atol=1e-5), (loss2, ref2)

    # 3) Class-axis streaming path: 2 C-blocks with a ragged (column-masked)
    #    last block (C=384 in 256-wide tiles) plus ragged rows.
    N3, C3 = 20, 384
    inputs3 = jax.random.normal(ks[5], (N3, C3), dtype=jnp.float32)
    target3 = jax.random.normal(ks[6], (N3, C3), dtype=jnp.float32)
    loss3 = soft_cross_entropy(inputs3, target3, None, tile_rows=8, tile_cols=256)
    jax.block_until_ready(loss3)
    ref3 = _reference(inputs3, target3)
    assert jnp.allclose(loss3, ref3, rtol=1e-5, atol=1e-5), (loss3, ref3)

    print("KERNEL_OK")
</pallas_src>

<mosaic_0001>
module attributes {stable_mosaic.version = 11 : i64} {
  func.func @_soft_ce_kernel(%arg0: i32, %arg1: i32, %arg2: memref<8x32xf32, #tpu.memory_space<vmem>>, %arg3: memref<8x32xf32, #tpu.memory_space<vmem>>, %arg4: memref<1x1x128xf32, #tpu.memory_space<vmem>>, %arg5: memref<8x1xf32, #tpu.memory_space<vmem>>, %arg6: memref<8x1xf32, #tpu.memory_space<vmem>>, %arg7: memref<8x1xf32, #tpu.memory_space<vmem>>, %arg8: memref<8x1xf32, #tpu.memory_space<vmem>>, %arg9: memref<8x1xf32, #tpu.memory_space<vmem>>) attributes {dimension_semantics = [#tpu.dimension_semantics<parallel>, #tpu.dimension_semantics<arbitrary>], iteration_bounds = array<i64: 1, 1>, scalar_prefetch = 0 : i64, scratch_operands = 5 : i64, tpu.core_type = #tpu.core_type<tc>, window_params = [{transform_indices = @transform_0, window_bounds = array<i64: 8, 32>}, {transform_indices = @transform_1, window_bounds = array<i64: 8, 32>}, {transform_indices = @transform_2, window_bounds = array<i64: 1, 1, 128>}]} {
    %c0_i32 = arith.constant 0 : i32
    %0 = arith.cmpi eq, %arg1, %c0_i32 : i32
    %1 = arith.extui %0 : i1 to i32
    %c0_i32_0 = arith.constant 0 : i32
    %2 = arith.cmpi ne, %1, %c0_i32_0 : i32
    scf.if %2 {
      %cst_34 = arith.constant -1.000000e+30 : f32
      %50 = vector.broadcast %cst_34 : f32 to vector<8x1xf32>
      %c0_35 = arith.constant 0 : index
      %c0_36 = arith.constant 0 : index
      %51 = vector.load %arg5[%c0_35, %c0_36] : memref<8x1xf32, #tpu.memory_space<vmem>>, vector<8x1xf32>
      tpu.vector_store %arg5[%c0_35, %c0_36], %50 {strides = array<i32>} : memref<8x1xf32, #tpu.memory_space<vmem>>, vector<8x1xf32>,
      %cst_37 = arith.constant -1.000000e+30 : f32
      %52 = vector.broadcast %cst_37 : f32 to vector<8x1xf32>
      %c0_38 = arith.constant 0 : index
      %c0_39 = arith.constant 0 : index
      %53 = vector.load %arg8[%c0_38, %c0_39] : memref<8x1xf32, #tpu.memory_space<vmem>>, vector<8x1xf32>
      tpu.vector_store %arg8[%c0_38, %c0_39], %52 {strides = array<i32>} : memref<8x1xf32, #tpu.memory_space<vmem>>, vector<8x1xf32>,
      %cst_40 = arith.constant 0.000000e+00 : f32
      %54 = vector.broadcast %cst_40 : f32 to vector<8x1xf32>
      %c0_41 = arith.constant 0 : index
      %c0_42 = arith.constant 0 : index
      %55 = vector.load %arg6[%c0_41, %c0_42] : memref<8x1xf32, #tpu.memory_space<vmem>>, vector<8x1xf32>
      tpu.vector_store %arg6[%c0_41, %c0_42], %54 {strides = array<i32>} : memref<8x1xf32, #tpu.memory_space<vmem>>, vector<8x1xf32>,
      %cst_43 = arith.constant 0.000000e+00 : f32
      %56 = vector.broadcast %cst_43 : f32 to vector<8x1xf32>
      %c0_44 = arith.constant 0 : index
      %c0_45 = arith.constant 0 : index
      %57 = vector.load %arg9[%c0_44, %c0_45] : memref<8x1xf32, #tpu.memory_space<vmem>>, vector<8x1xf32>
      tpu.vector_store %arg9[%c0_44, %c0_45], %56 {strides = array<i32>} : memref<8x1xf32, #tpu.memory_space<vmem>>, vector<8x1xf32>,
      %cst_46 = arith.constant 0.000000e+00 : f32
      %58 = vector.broadcast %cst_46 : f32 to vector<8x1xf32>
      %c0_47 = arith.constant 0 : index
      %c0_48 = arith.constant 0 : index
      %59 = vector.load %arg7[%c0_47, %c0_48] : memref<8x1xf32, #tpu.memory_space<vmem>>, vector<8x1xf32>
      tpu.vector_store %arg7[%c0_47, %c0_48], %58 {strides = array<i32>} : memref<8x1xf32, #tpu.memory_space<vmem>>, vector<8x1xf32>,
    } else {
    }
    %c0 = arith.constant 0 : index
    %c0_1 = arith.constant 0 : index
    %3 = vector.load %arg2[%c0, %c0_1] : memref<8x32xf32, #tpu.memory_space<vmem>>, vector<8x32xf32>
    %c0_2 = arith.constant 0 : index
    %c0_3 = arith.constant 0 : index
    %4 = vector.load %arg3[%c0_2, %c0_3] : memref<8x32xf32, #tpu.memory_space<vmem>>, vector<8x32xf32>
    %c0_4 = arith.constant 0 : index
    %c0_5 = arith.constant 0 : index
    %5 = vector.load %arg5[%c0_4, %c0_5] : memref<8x1xf32, #tpu.memory_space<vmem>>, vector<8x1xf32>
    %cst = arith.constant dense<0xFF800000> : vector<8xf32>
    %6 = vector.multi_reduction <maximumf>, %4, %cst [1] : vector<8x32xf32> to vector<8xf32>
    %7 = vector.shape_cast %6 : vector<8xf32> to vector<8x1xf32>
    %8 = arith.maximumf %5, %7 : vector<8x1xf32>
    %c0_6 = arith.constant 0 : index
    %c0_7 = arith.constant 0 : index
    %9 = vector.load %arg5[%c0_6, %c0_7] : memref<8x1xf32, #tpu.memory_space<vmem>>, vector<8x1xf32>
    %10 = arith.subf %9, %8 : vector<8x1xf32>
    %11 = math.exp %10 : vector<8x1xf32>
    %12 = vector.broadcast %8 : vector<8x1xf32> to vector<8x32xf32>
    %13 = arith.subf %4, %12 : vector<8x32xf32>
    %14 = math.exp %13 : vector<8x32xf32>
    %c0_8 = arith.constant 0 : index
    %c0_9 = arith.constant 0 : index
    %15 = vector.load %arg6[%c0_8, %c0_9] : memref<8x1xf32, #tpu.memory_space<vmem>>, vector<8x1xf32>
    %16 = arith.mulf %15, %11 : vector<8x1xf32>
    %cst_10 = arith.constant dense<0.000000e+00> : vector<8xf32>
    %17 = vector.multi_reduction <add>, %14, %cst_10 [1] : vector<8x32xf32> to vector<8xf32>
    %18 = vector.shape_cast %17 : vector<8xf32> to vector<8x1xf32>
    %19 = arith.addf %16, %18 : vector<8x1xf32>
    %c0_11 = arith.constant 0 : index
    %c0_12 = arith.constant 0 : index
    %20 = vector.load %arg6[%c0_11, %c0_12] : memref<8x1xf32, #tpu.memory_space<vmem>>, vector<8x1xf32>
    tpu.vector_store %arg6[%c0_11, %c0_12], %19 {strides = array<i32>} : memref<8x1xf32, #tpu.memory_space<vmem>>, vector<8x1xf32>,
    %c0_13 = arith.constant 0 : index
    %c0_14 = arith.constant 0 : index
    %21 = vector.load %arg7[%c0_13, %c0_14] : memref<8x1xf32, #tpu.memory_space<vmem>>, vector<8x1xf32>
    %22 = arith.mulf %21, %11 : vector<8x1xf32>
    %23 = arith.subf %4, %3 : vector<8x32xf32>
    %24 = arith.mulf %14, %23 : vector<8x32xf32>
    %cst_15 = arith.constant dense<0.000000e+00> : vector<8xf32>
    %25 = vector.multi_reduction <add>, %24, %cst_15 [1] : vector<8x32xf32> to vector<8xf32>
    %26 = vector.shape_cast %25 : vector<8xf32> to vector<8x1xf32>
    %27 = arith.addf %22, %26 : vector<8x1xf32>
    %c0_16 = arith.constant 0 : index
    %c0_17 = arith.constant 0 : index
    %28 = vector.load %arg7[%c0_16, %c0_17] : memref<8x1xf32, #tpu.memory_space<vmem>>, vector<8x1xf32>
    tpu.vector_store %arg7[%c0_16, %c0_17], %27 {strides = array<i32>} : memref<8x1xf32, #tpu.memory_space<vmem>>, vector<8x1xf32>,
    %c0_18 = arith.constant 0 : index
    %c0_19 = arith.constant 0 : index
    %29 = vector.load %arg5[%c0_18, %c0_19] : memref<8x1xf32, #tpu.memory_space<vmem>>, vector<8x1xf32>
    tpu.vector_store %arg5[%c0_18, %c0_19], %8 {strides = array<i32>} : memref<8x1xf32, #tpu.memory_space<vmem>>, vector<8x1xf32>,
    %c0_20 = arith.constant 0 : index
    %c0_21 = arith.constant 0 : index
    %30 = vector.load %arg8[%c0_20, %c0_21] : memref<8x1xf32, #tpu.memory_space<vmem>>, vector<8x1xf32>
    %cst_22 = arith.constant dense<0xFF800000> : vector<8xf32>
    %31 = vector.multi_reduction <maximumf>, %3, %cst_22 [1] : vector<8x32xf32> to vector<8xf32>
    %32 = vector.shape_cast %31 : vector<8xf32> to vector<8x1xf32>
    %33 = arith.maximumf %30, %32 : vector<8x1xf32>
    %c0_23 = arith.constant 0 : index
    %c0_24 = arith.constant 0 : index
    %34 = vector.load %arg9[%c0_23, %c0_24] : memref<8x1xf32, #tpu.memory_space<vmem>>, vector<8x1xf32>
    %c0_25 = arith.constant 0 : index
    %c0_26 = arith.constant 0 : index
    %35 = vector.load %arg8[%c0_25, %c0_26] : memref<8x1xf32, #tpu.memory_space<vmem>>, vector<8x1xf32>
    %36 = arith.subf %35, %33 : vector<8x1xf32>
    %37 = math.exp %36 : vector<8x1xf32>
    %38 = arith.mulf %34, %37 : vector<8x1xf32>
    %39 = vector.broadcast %33 : vector<8x1xf32> to vector<8x32xf32>
    %40 = arith.subf %3, %39 : vector<8x32xf32>
    %41 = math.exp %40 : vector<8x32xf32>
    %cst_27 = arith.constant dense<0.000000e+00> : vector<8xf32>
    %42 = vector.multi_reduction <add>, %41, %cst_27 [1] : vector<8x32xf32> to vector<8xf32>
    %43 = vector.shape_cast %42 : vector<8xf32> to vector<8x1xf32>
    %44 = arith.addf %38, %43 : vector<8x1xf32>
    %c0_28 = arith.constant 0 : index
    %c0_29 = arith.constant 0 : index
    %45 = vector.load %arg9[%c0_28, %c0_29] : memref<8x1xf32, #tpu.memory_space<vmem>>, vector<8x1xf32>
    tpu.vector_store %arg9[%c0_28, %c0_29], %44 {strides = array<i32>} : memref<8x1xf32, #tpu.memory_space<vmem>>, vector<8x1xf32>,
    %c0_30 = arith.constant 0 : index
    %c0_31 = arith.constant 0 : index
    %46 = vector.load %arg8[%c0_30, %c0_31] : memref<8x1xf32, #tpu.memory_space<vmem>>, vector<8x1xf32>
    tpu.vector_store %arg8[%c0_30, %c0_31], %33 {strides = array<i32>} : memref<8x1xf32, #tpu.memory_space<vmem>>, vector<8x1xf32>,
    %c0_i32_32 = arith.constant 0 : i32
    %47 = arith.cmpi eq, %arg1, %c0_i32_32 : i32
    %48 = arith.extui %47 : i1 to i32
    %c0_i32_33 = arith.constant 0 : i32
    %49 = arith.cmpi ne, %48, %c0_i32_33 : i32
    scf.if %49 {
      %c0_34 = arith.constant 0 : index
      %c0_35 = arith.constant 0 : index
      %50 = vector.load %arg8[%c0_34, %c0_35] : memref<8x1xf32, #tpu.memory_space<vmem>>, vector<8x1xf32>
      %c0_36 = arith.constant 0 : index
      %c0_37 = arith.constant 0 : index
      %51 = vector.load %arg9[%c0_36, %c0_37] : memref<8x1xf32, #tpu.memory_space<vmem>>, vector<8x1xf32>
      %52 = math.log %51 : vector<8x1xf32>
      %53 = arith.addf %50, %52 : vector<8x1xf32>
      %c0_38 = arith.constant 0 : index
      %c0_39 = arith.constant 0 : index
      %54 = vector.load %arg5[%c0_38, %c0_39] : memref<8x1xf32, #tpu.memory_space<vmem>>, vector<8x1xf32>
      %c0_40 = arith.constant 0 : index
      %c0_41 = arith.constant 0 : index
      %55 = vector.load %arg6[%c0_40, %c0_41] : memref<8x1xf32, #tpu.memory_space<vmem>>, vector<8x1xf32>
      %56 = math.log %55 : vector<8x1xf32>
      %57 = arith.addf %54, %56 : vector<8x1xf32>
      %c0_42 = arith.constant 0 : index
      %c0_43 = arith.constant 0 : index
      %58 = vector.load %arg7[%c0_42, %c0_43] : memref<8x1xf32, #tpu.memory_space<vmem>>, vector<8x1xf32>
      %c0_44 = arith.constant 0 : index
      %c0_45 = arith.constant 0 : index
      %59 = vector.load %arg6[%c0_44, %c0_45] : memref<8x1xf32, #tpu.memory_space<vmem>>, vector<8x1xf32>
      %60 = arith.divf %58, %59 : vector<8x1xf32>
      %61 = arith.subf %53, %57 : vector<8x1xf32>
      %62 = arith.addf %60, %61 : vector<8x1xf32>
      %c8_i32 = arith.constant 8 : i32
      %63 = arith.muli %arg0, %c8_i32 : i32
      %64 = tpu.iota {dimensions = array<i32: 0>} : vector<8x1xi32>
      %65 = vector.broadcast %63 : i32 to vector<8x1xi32>
      %66 = arith.addi %65, %64 : vector<8x1xi32>
      %c8_i32_46 = arith.constant 8 : i32
      %67 = vector.broadcast %c8_i32_46 : i32 to vector<8x1xi32>
      %68 = arith.cmpi slt, %66, %67 : vector<8x1xi32>
      %cst_47 = arith.constant 0.000000e+00 : f32
      %69 = vector.broadcast %cst_47 : f32 to vector<8x1xf32>
      %70 = arith.select %68, %62, %69 : vector<8x1xi1>, vector<8x1xf32>
      %71 = vector.shape_cast %70 : vector<8x1xf32> to vector<1x8x1xf32>
      %cst_48 = arith.constant dense<0.000000e+00> : vector<1xf32>
      %72 = vector.multi_reduction <add>, %71, %cst_48 [1, 2] : vector<1x8x1xf32> to vector<1xf32>
      %73 = vector.shape_cast %72 : vector<1xf32> to vector<1x1x1xf32>
      %74 = vector.extract %73[0, 0, 0] : f32 from vector<1x1x1xf32>
      %75 = vector.broadcast %74 : f32 to vector<1x1x128xf32>
      %c0_49 = arith.constant 0 : index
      %c0_50 = arith.constant 0 : index
      %c0_51 = arith.constant 0 : index
      %76 = vector.load %arg4[%c0_49, %c0_50, %c0_51] : memref<1x1x128xf32, #tpu.memory_space<vmem>>, vector<1x1x128xf32>
      tpu.vector_store %arg4[%c0_49, %c0_50, %c0_51], %75 {strides = array<i32>} : memref<1x1x128xf32, #tpu.memory_space<vmem>>, vector<1x1x128xf32>,
    } else {
    }
    return
  }
  func.func @transform_0(%arg0: i32, %arg1: i32) -> (i32, i32) {
    %c0_i32 = arith.constant 0 : i32
    return %arg0, %arg1 : i32, i32
  }
  func.func @transform_1(%arg0: i32, %arg1: i32) -> (i32, i32) {
    %c0_i32 = arith.constant 0 : i32
    return %arg0, %arg1 : i32, i32
  }
  func.func @transform_2(%arg0: i32, %arg1: i32) -> (i32, i32, i32) {
    %c0_i32 = arith.constant 0 : i32
    %c0_i32_0 = arith.constant 0 : i32
    %c0_i32_1 = arith.constant 0 : i32
    return %arg0, %c0_i32, %c0_i32_0 : i32, i32, i32
  }
}

</mosaic_0001>

<llo_original>
// kernel: tpu_custom_call.1
$region0: #{tpu_custom_call.1}
  #allocation0 [shape = 'u32[]', space=smem, size = 0x4, offset = 0x4, fixed_abs, tag = 'smem constant byte address 0x4 - core index']
  #allocation1 [shape = 'u32[72,128]{1,0:T(1,128)}', space=vmem, size = 0x9000, scoped, tag = 'internal scratch']
  #allocation2 [shape = 'f32[8,1]{1,0:T(8,128)}', space=vmem, size = 0x1000, scoped, tag = 'scratch operand']
  #allocation3 [shape = 'f32[8,1]{1,0:T(8,128)}', space=vmem, size = 0x1000, scoped, tag = 'scratch operand']
  #allocation4 [shape = 'f32[8,1]{1,0:T(8,128)}', space=vmem, size = 0x1000, scoped, tag = 'scratch operand']
  #allocation5 [shape = 'f32[8,1]{1,0:T(8,128)}', space=vmem, size = 0x1000, scoped, tag = 'scratch operand']
  #allocation6 [shape = 'f32[8,1]{1,0:T(8,128)}', space=vmem, size = 0x1000, scoped, tag = 'scratch operand']
  %s0 = inlined_call_operand.hbm [shape: f32[8,32], index: 0, kind: input, shape index: {}]
  %s1 = inlined_call_operand.hbm [shape: f32[8,32], index: 1, kind: input, shape index: {}]
  %s2 = inlined_call_operand.hbm [shape: f32[1,1,128], index: 2, kind: output, shape index: {}]
  %s3 = sld [smem:[#allocation0]]
  $region34: #{tpu_custom_call.1} parent=0
    _
  %s5 = ssub.s32 1, %s3
  %s6 = scalar_select 0, %s5, %s3
  $region1: #{tpu_custom_call.1} parent=0
    #allocation7 [shape = 'u8[4096]{0}', space=vmem, size = 0x1000, scoped, tag = 'input window, operand 0, single buffered']
    #allocation8 [shape = 's32[1]{0}', space=sflag, size = 0x4, scoped, tag = 'scoped memory for tpu_custom_call.1']
    #allocation9 [shape = 's32[1]{0}', space=sflag, size = 0x4, scoped, tag = 'scoped memory for tpu_custom_call.1']
    #allocation10 [shape = 'u8[4096]{0}', space=vmem, size = 0x1000, scoped, tag = 'input window, operand 1, single buffered']
    #allocation11 [shape = 's32[1]{0}', space=sflag, size = 0x4, scoped, tag = 'scoped memory for tpu_custom_call.1']
    #allocation12 [shape = 'u8[512]{0}', space=vmem, size = 0x400, scoped, tag = 'output window, operand 0, single buffered']
    %7 = vsyncpa [#allocation8], 0
    %8 = vsyncpa [#allocation11], 0
    %9 = vsyncpa [#allocation9], 0
    // Predicated region
    $region2: #{tpu_custom_call.1} parent=1 // pred_check
      _
    $region3: #{tpu_custom_call.1} parent=1 // pred_check_branch
      %11 = sbr.rel (0) target = $region5
    $region4: #{tpu_custom_call.1} parent=1 // pred_region
      %13 = vsyncadd [#allocation8], 0
      %s15 = sshll.u32 %s0, 4
      %s16 = int_to_ptr.hbm [resolvable:$true] %s15
      %s17 = sshll.u32 [#allocation7], 4
      %s18 = int_to_ptr.vmem [resolvable:$true] %s17
      %20 = dma.hbm_to_vmem [thread:$0]  %s16, 128, %s18, [#allocation8]
    $region5: #{tpu_custom_call.1} parent=1 // pred_fallthru
      _
    // Predicated region
    $region6: #{tpu_custom_call.1} parent=1 // pred_check
      _
    $region7: #{tpu_custom_call.1} parent=1 // pred_check_branch
      %22 = sbr.rel (0) target = $region9
    $region8: #{tpu_custom_call.1} parent=1 // pred_region
      %24 = vsyncadd [#allocation11], 0
      %s26 = sshll.u32 %s1, 4
      %s27 = int_to_ptr.hbm [resolvable:$true] %s26
      %s28 = sshll.u32 [#allocation10], 4
      %s29 = int_to_ptr.vmem [resolvable:$true] %s28
      %31 = dma.hbm_to_vmem [thread:$0]  %s27, 128, %s29, [#allocation11]
    $region9: #{tpu_custom_call.1} parent=1 // pred_fallthru
      _
    // Predicated region
    $region10: #{tpu_custom_call.1} parent=1 // pred_check
      _
    $region11: #{tpu_custom_call.1} parent=1 // pred_check_branch
      %33 = sbr.rel (0) target = $region13
    $region12: #{tpu_custom_call.1} parent=1 // pred_region
      %35 = dma.done [#allocation8], 128
    $region13: #{tpu_custom_call.1} parent=1 // pred_fallthru
      _
    // Predicated region
    $region14: #{tpu_custom_call.1} parent=1 // pred_check
      _
    $region15: #{tpu_custom_call.1} parent=1 // pred_check_branch
      %37 = sbr.rel (0) target = $region17
    $region16: #{tpu_custom_call.1} parent=1 // pred_region
      %39 = dma.done [#allocation11], 128
    $region17: #{tpu_custom_call.1} parent=1 // pred_fallthru
      _
    %p40 = scmp.eq.s32.totalorder 0, 0
    // Predicated region
    $region18: #{tpu_custom_call.1} parent=1 // pred_check
      %p41 = pneg %p40
    $region19: #{tpu_custom_call.1} parent=1 // pred_check_branch
      %43 = sbr.rel (%p41) target = $region21
    $region20: #{tpu_custom_call.1} parent=1 // pred_region
      %vm44 = vcmask 7168
      %45 = vst.msk [vmem:[#allocation2] sm:$0xff] %vm44, -1e+30
      %46 = vst.msk [vmem:[#allocation5] sm:$0xff] %vm44, -1e+30
      %47 = vst.msk [vmem:[#allocation3] sm:$0xff] %vm44, 0.0
      %48 = vst.msk [vmem:[#allocation6] sm:$0xff] %vm44, 0.0
      %49 = vst.msk [vmem:[#allocation4] sm:$0xff] %vm44, 0.0
    $region21: #{tpu_custom_call.1} parent=1 // pred_fallthru
      _
    %v50 = vld [vmem:[#allocation7] sm:$0xff]
    %v51 = vld [vmem:[#allocation10] sm:$0xff]
    %v52 = vld [vmem:[#allocation2] sm:$0xff]
    %vm53 = vcmask 261120
    %v54 = vsel %vm53, %v51, -inf
    %55 = vmax.xlane.f32.xlu0 %v54
    %v56 = vpop.xlane.xlu0 %55
    %v57 = vmax.f32 %v52, %v56
    %v58 = vsub.f32 %v52, %v57
    %v59 = vmul.f32 %v58, 1.442695
    %v60 = vpow.pop %v59
    %62 = vset.pattern.permute.xlu0 0
    %63 = vperm.xlu0 %62, %v57
    %v64 = vpop.permute.xlu0 %63
    %v66 = vsub.f32 %v51, %v64
    %v67 = vmul.f32 %v66, 1.442695
    %v68 = vpow.pop %v67
    %v69 = vld [vmem:[#allocation3] sm:$0xff]
    %v70 = vmul.f32 %v69, %v60
    %v71 = vsel %vm53, %v68, 0.0
    %72 = vadd.xlane.f32.xlu0 %v71
    %v73 = vpop.xlane.xlu0 %72
    %v74 = vadd.f32 %v70, %v73
    %vm75 = vcmask 7168
    %76 = vst.msk [vmem:[#allocation3] sm:$0xff] %vm75, %v74
    %v77 = vld [vmem:[#allocation4] sm:$0xff]
    %v78 = vmul.f32 %v77, %v60
    %v79 = vsub.f32 %v51, %v50
    %v80 = vmul.f32 %v68, %v79
    %v81 = vsel %vm53, %v80, 0.0
    %82 = vadd.xlane.f32.xlu0 %v81
    %v83 = vpop.xlane.xlu0 %82
    %v84 = vadd.f32 %v78, %v83
    %85 = vst.msk [vmem:[#allocation4] sm:$0xff] %vm75, %v84
    %86 = vst.msk [vmem:[#allocation2] sm:$0xff] %vm75, %v57
    %v87 = vld [vmem:[#allocation5] sm:$0xff]
    %v88 = vsel %vm53, %v50, -inf
    %89 = vmax.xlane.f32.xlu0 %v88
    %v90 = vpop.xlane.xlu0 %89
    %v91 = vmax.f32 %v87, %v90
    %v92 = vld [vmem:[#allocation6] sm:$0xff]
    %v93 = vsub.f32 %v87, %v91
    %v94 = vmul.f32 %v93, 1.442695
    %v95 = vpow.pop %v94
    %v96 = vmul.f32 %v92, %v95
    %98 = vset.pattern.permute.xlu0 0
    %99 = vperm.xlu0 %98, %v91
    %v100 = vpop.permute.xlu0 %99
    %v102 = vsub.f32 %v50, %v100
    %v103 = vmul.f32 %v102, 1.442695
    %v104 = vpow.pop %v103
    %v105 = vsel %vm53, %v104, 0.0
    %106 = vadd.xlane.f32.xlu0 %v105
    %v107 = vpop.xlane.xlu0 %106
    %v108 = vadd.f32 %v96, %v107
    %109 = vst.msk [vmem:[#allocation6] sm:$0xff] %vm75, %v108
    %110 = vst.msk [vmem:[#allocation5] sm:$0xff] %vm75, %v91
    // Predicated region
    $region22: #{tpu_custom_call.1} parent=1 // pred_check
      %p111 = pneg %p40
    $region23: #{tpu_custom_call.1} parent=1 // pred_check_branch
      %113 = sbr.rel (%p111) target = $region25
    $region24: #{tpu_custom_call.1} parent=1 // pred_region
      %v114 = vld [vmem:[#allocation5] sm:$0xff]
      %v115 = vld [vmem:[#allocation6] sm:$0xff]
      %v116 = vlog2.pop %v115
      %v117 = vmul.f32 %v116, 0.6931472
      %v118 = vadd.f32 %v114, %v117
      %v119 = vld [vmem:[#allocation2] sm:$0xff]
      %v120 = vld [vmem:[#allocation3] sm:$0xff]
      %v121 = vlog2.pop %v120
      %v122 = vmul.f32 %v121, 0.6931472
      %v123 = vadd.f32 %v119, %v122
      %v124 = vld [vmem:[#allocation4] sm:$0xff]
      %v125 = vrcp.pop %v120
      %v126 = vmul.f32 %v120, %v125
      %v127 = vsub.f32 1.0, %v126
      %v128 = vmul.f32 %v125, %v127
      %v129 = vadd.f32 %v125, %v128
      %vm130 = vweird.f32 %v120
      %vm131 = vweird.f32 %v125
      %vm132 = vmor %vm130, %vm131
      %v133 = vsel %vm132, %v125, %v129
      %v134 = vand.u32 2147483647, %v120
      %vm135 = vcmp.eq.f32.partialorder %v134, 8.507059e+37
      %v136 = vand.u32 %v120, 2147483648
      %v137 = vor.u32 1.1754944e-38, %v136
      %v138 = vsel %vm135, %v137, %v133
      %v139 = vmul.f32 %v124, %v138
      %v140 = vsub.f32 %v118, %v123
      %v141 = vadd.f32 %v139, %v140
      %s142 = smul.u32 0, 8
      %v143 = vlaneseq
      %v144 = vshrl.u32 %v143, 7
      %v145 = vstv %s142
      %v146 = vadd.s32 %v145, %v144
      %vm147 = vcmp.lt.s32.totalorder %v146, 8
      %v148 = vsel %vm147, %v141, 0.0
      %v149 = vsel %vm75, %v148, 0.0
      %150 = vadd.xlane.f32.xlu0 %v149
      %v151 = vpop.xlane.xlu0 %150
      %v152 = vrot.slane %v151, 4
      %v153 = vadd.f32 %v151, %v152
      %v154 = vrot.slane %v153, 2
      %v155 = vadd.f32 %v153, %v154
      %v156 = vrot.slane %v155, 1
      %v157 = vadd.f32 %v155, %v156
      %s158 = vtos %v157
      %v159 = vstv %s158
      %160 = vst [vmem:[#allocation12] sm:$0x1] %v159
    $region25: #{tpu_custom_call.1} parent=1 // pred_fallthru
      _
    // Predicated region
    $region26: #{tpu_custom_call.1} parent=1 // pred_check
      _
    $region27: #{tpu_custom_call.1} parent=1 // pred_check_branch
      %162 = sbr.rel (0) target = $region29
    $region28: #{tpu_custom_call.1} parent=1 // pred_region
      %164 = vsyncadd [#allocation9], 0
      %s166 = sshll.u32 [#allocation12], 4
      %s167 = int_to_ptr.vmem [resolvable:$true] %s166
      %s168 = sshll.u32 %s2, 4
      %s169 = int_to_ptr.hbm [resolvable:$true] %s168
      %171 = dma.vmem_to_hbm [thread:$0]  %s167, 16, %s169, [#allocation9]
    $region29: #{tpu_custom_call.1} parent=1 // pred_fallthru
      _
    // Predicated region
    $region30: #{tpu_custom_call.1} parent=1 // pred_check
      _
    $region31: #{tpu_custom_call.1} parent=1 // pred_check_branch
      %173 = sbr.rel (0) target = $region33
    $region32: #{tpu_custom_call.1} parent=1 // pred_region
      %175 = dma.done [#allocation9], 16
    $region33: #{tpu_custom_call.1} parent=1 // pred_fallthru
      _
    %176 = vsyncpa [#allocation8], 1
    %177 = vsyncpa [#allocation11], 1
    %178 = vsyncpa [#allocation9], 1

</llo_original>
